<compile_context>
chip_gen: v7x
topology: tpu7x:2x2x1
jax: 0.10.0
libtpu: 0.0.40
codegen_flags: <defaults>
</compile_context>

<pallas_src>
from functools import partial

import numpy as np
import jax
import jax.numpy as jnp
from jax.experimental import pallas as pl
from jax.experimental.pallas import tpu as pltpu


def _round_up(x, m):
    return (x + m - 1) // m * m


# ---------------------------------------------------------------------------
# Fused kernel:
#   xg   = gsel @ x                (static row gather + conv1 pad mask, on MXU)
#   a1   = relu(xg @ W1f + b1)     (conv1 + folded BN1 + ReLU)
#   a1  *= inner_mask              (conv2 taps that land in out1's zero padding)
#   out  = relu(a1 @ W2f + b2 + x) (conv2 + folded BN2 + residual + ReLU)
# x doubles as conv1 source and residual; output stored in bf16.
# ---------------------------------------------------------------------------
def _fused_block_kernel(x_ref, gsel_ref, mi_ref, w1_ref, b1_ref, w2_ref, b2_ref,
                        o_ref):
    x = x_ref[...]                                   # (TM, C): conv source AND residual
    x_bf = x.astype(jnp.bfloat16)

    # Static per-tile row gather + conv1 zero-pad mask as a 0/1 one-hot matmul.
    # Rows are exact copies (single-term sums), so no extra rounding is introduced.
    xg = jnp.dot(gsel_ref[...], x_bf,
                 preferred_element_type=jnp.float32).astype(jnp.bfloat16)

    # conv1 (1x1) + folded BN1 + ReLU.  NOTE(v6e/v7x): C=128 only fills a 128x128
    # corner of the 256x256 MXU -- fine while HBM-bound; revisit if C >= 256.
    h1 = jnp.dot(xg, w1_ref[...], preferred_element_type=jnp.float32)
    a1 = jnp.maximum(h1 + b1_ref[...], 0.0)

    # conv2 taps that land in out1's zero padding contribute nothing
    # (valid because outer-mask rows are a subset of inner-mask rows; asserted).
    a1 = (a1 * mi_ref[...]).astype(jnp.bfloat16)

    # conv2 (1x1) + folded BN2 + residual + final ReLU (f32 epilogue, bf16 store).
    h2 = jnp.dot(a1, w2_ref[...], preferred_element_type=jnp.float32)
    out = h2 + b2_ref[...] + x.astype(jnp.float32)
    o_ref[...] = jnp.maximum(out, 0.0).astype(o_ref.dtype)


# ---------------------------------------------------------------------------
# Static (shape-only) composition of the two k=1 / pad=1 / stride samplings
# ---------------------------------------------------------------------------
def _build_sampling(H, W, stride):
    """Per final-output spatial position:
         src_sp : flattened (h*W + w) source pixel of x feeding conv1
         outer  : 1.0 if that source is a real x pixel (else conv1 sees zero pad)
         inner  : 1.0 if conv2's tap lands inside out1 (else conv2 sees zero pad)
    """
    H1 = (H + 1) // stride + 1
    W1 = (W + 1) // stride + 1
    H2 = (H1 + 1) // stride + 1
    W2 = (W1 + 1) // stride + 1

    oh2 = np.arange(H2)[:, None]
    ow2 = np.arange(W2)[None, :]
    h1 = oh2 * stride - 1                 # position in out1 tapped by conv2
    w1 = ow2 * stride - 1
    inner = (h1 >= 0) & (h1 < H1) & (w1 >= 0) & (w1 < W1)
    hx = h1 * stride - 1                  # position in x tapped by conv1
    wx = w1 * stride - 1
    outer = inner & (hx >= 0) & (hx < H) & (wx >= 0) & (wx < W)
    # masked-after-ReLU trick in the kernel relies on outer ⊆ inner:
    assert np.all(inner | ~outer), "outer mask must be a subset of inner mask"
    src_sp = np.where(outer, hx * W + wx, 0).astype(np.int32)
    return (H2, W2, src_sp.reshape(-1),
            outer.reshape(-1).astype(np.float32),
            inner.reshape(-1).astype(np.float32))


def _pick_tile_rows(N, S, target_rows, align=16):
    """Whole-image row tile TM = NB*S with NB | N and TM % align == 0 (bf16 sublane
    packing).  Prefers >=2 (ideally an even number of) grid steps so v7x's two
    TensorCores both get work; falls back to the full extent (a block_shape equal
    to the array shape is always legal)."""
    cands = [d for d in range(1, N + 1) if N % d == 0 and (d * S) % align == 0]
    multi = [d for d in cands if d < N]
    if multi:
        fit = [d for d in multi if d * S <= target_rows]
        pool = fit if fit else [min(multi)]
        even = [d for d in pool if (N // d) % 2 == 0]
        return (max(even) if even else max(pool)) * S
    return N * S


def _vmem_estimate(TM, C, x_itemsize):
    """Padded VMEM footprint of the pipeline buffers (double-buffered)."""
    def tile(r, c, it):
        return _round_up(r, 16) * _round_up(c, 128) * it
    est = 2 * tile(TM, C, x_itemsize)                      # streamed x
    est += 2 * tile(TM, C, 2)                              # streamed bf16 output
    est += 2 * (tile(TM, TM, 2) + tile(TM, 1, 4)           # resident gsel + mask
                + 2 * tile(C, C, 2) + 2 * tile(1, C, 4))   # resident weights/biases
    return est


# ---------------------------------------------------------------------------
# NHWC hot path (no layout transposes): the function a network should call.
# ---------------------------------------------------------------------------
@partial(jax.jit, static_argnums=(2, 3))
def basic_block_forward_nhwc(x_nhwc, params, stride, tile_rows=1024):
    N, H, W, Cin = x_nhwc.shape
    eps = 1e-5

    H2, W2, src_sp, outer_sp, inner_sp = _build_sampling(H, W, stride)
    Cout = params["w1"].shape[1]
    assert (H2, W2) == (H, W) and Cout == Cin, (
        "residual add requires the k=1/pad=1 conv chain to preserve the spatial "
        "shape (e.g. H=W=3 with stride=2) and input_channel == out_channel")

    # ---- fold inference-mode BN into weights / bias; matmul operands -> bf16
    def fold(w, g, b, m, v):
        scale = g / jnp.sqrt(v + eps)
        w_f = (w * scale[None, :]).astype(jnp.bfloat16)            # (Cin, Cout)
        bias = (b - m * scale).reshape(1, -1).astype(jnp.float32)  # (1, Cout)
        return w_f, bias

    w1f, b1 = fold(params["w1"], params["bn1_gamma"], params["bn1_beta"],
                   params["bn1_mean"], params["bn1_var"])
    w2f, b2 = fold(params["w2"], params["bn2_gamma"], params["bn2_beta"],
                   params["bn2_mean"], params["bn2_var"])

    # ---- tiling: whole images per tile, so every gathered source row is in-tile
    S = H2 * W2
    M = N * S
    TM = _pick_tile_rows(N, S, tile_rows)
    assert M % TM == 0 and TM % S == 0
    NB = TM // S

    # trace-time numpy constants only -- nothing activation-sized is written to HBM
    j = np.arange(TM)
    img, sp = j // S, j % S
    gsel_np = np.zeros((TM, TM), np.float32)                 # gather + conv1 pad mask
    gsel_np[j, img * S + src_sp[sp]] = outer_sp[sp]
    mask_np = np.tile(inner_sp, NB).reshape(TM, 1)           # conv2 pad mask (resident)
    gsel = jnp.asarray(gsel_np, dtype=jnp.bfloat16)
    mask_inner = jnp.asarray(mask_np, dtype=jnp.float32)

    x2d = x_nhwc.reshape(M, Cin)              # pure reshape: no transpose, no copy
    out_dtype = jnp.bfloat16                  # bf16 store halves output HBM traffic

    # VMEM budget re-derived from the tile footprint (v7x has only 64 MiB physical)
    est = _vmem_estimate(TM, Cout, x2d.dtype.itemsize)
    vmem_limit = int(min(max(4 * est, 16 * 1024 * 1024), 48 * 1024 * 1024))

    # alias x's HBM buffer to the output when dtypes match (x2d is a jit-internal
    # value here, so donation is safe; XLA copies if the operand has other uses)
    io_alias = {0: 0} if x2d.dtype == out_dtype else {}

    out2d = pl.pallas_call(
        _fused_block_kernel,
        out_shape=jax.ShapeDtypeStruct((M, Cout), out_dtype),
        grid=(M // TM,),
        in_specs=[
            pl.BlockSpec((TM, Cin), lambda i: (i, 0)),    # streamed x (conv src + residual)
            pl.BlockSpec((TM, TM), lambda i: (0, 0)),     # selection matrix   (resident)
            pl.BlockSpec((TM, 1), lambda i: (0, 0)),      # conv2 pad mask     (resident)
            pl.BlockSpec((Cin, Cout), lambda i: (0, 0)),  # W1 * bn1_scale     (resident)
            pl.BlockSpec((1, Cout), lambda i: (0, 0)),    # bn1 bias           (resident)
            pl.BlockSpec((Cout, Cout), lambda i: (0, 0)), # W2 * bn2_scale     (resident)
            pl.BlockSpec((1, Cout), lambda i: (0, 0)),    # bn2 bias           (resident)
        ],
        out_specs=pl.BlockSpec((TM, Cout), lambda i: (i, 0)),
        input_output_aliases=io_alias,
        compiler_params=pltpu.CompilerParams(
            dimension_semantics=("parallel",),            # shards rows across v7x's 2 TCs
            vmem_limit_bytes=vmem_limit,
        ),
    )(x2d, gsel, mask_inner, w1f, b1, w2f, b2)

    return out2d.reshape(N, H2, W2, Cout)


# ---------------------------------------------------------------------------
# Module-parity adapter (NCHW in / NCHW out).  The transposes are module-boundary
# glue only; a full network should stay NHWC and call the function above.
# ---------------------------------------------------------------------------
def basic_block_forward(x_nchw, params, stride, tile_rows=1024):
    x_nhwc = jnp.transpose(x_nchw, (0, 2, 3, 1))
    out = basic_block_forward_nhwc(x_nhwc, params, stride, tile_rows)
    return jnp.transpose(out, (0, 3, 1, 2))


# ---------------------------------------------------------------------------
# Pure-JAX reference (NCHW, f32, matches PyTorch eval-mode semantics)
# ---------------------------------------------------------------------------
def reference_forward(x_nchw, params, stride, eps=1e-5):
    def conv1x1(x, w_oihw):
        return jax.lax.conv_general_dilated(
            x, w_oihw, window_strides=(stride, stride),
            padding=((1, 1), (1, 1)),
            dimension_numbers=("NCHW", "OIHW", "NCHW"),
            precision=jax.lax.Precision.HIGHEST)

    def bn(x, g, b, m, v):
        g = g.reshape(1, -1, 1, 1); b = b.reshape(1, -1, 1, 1)
        m = m.reshape(1, -1, 1, 1); v = v.reshape(1, -1, 1, 1)
        return (x - m) / jnp.sqrt(v + eps) * g + b

    out = conv1x1(x_nchw, params["w1_oihw"])
    out = jnp.maximum(bn(out, params["bn1_gamma"], params["bn1_beta"],
                         params["bn1_mean"], params["bn1_var"]), 0.0)
    out = conv1x1(out, params["w2_oihw"])
    out = bn(out, params["bn2_gamma"], params["bn2_beta"],
             params["bn2_mean"], params["bn2_var"])
    out = out + x_nchw                                     # residual (downsample=None)
    return jnp.maximum(out, 0.0)


if __name__ == "__main__":
    key = jax.random.PRNGKey(0)
    N, C, H, W = 32, 128, 3, 3   # input_channel == out_channel (required by module)
    stride = 2                   # with H=W=3 the k=1/pad=1 convs preserve H, W

    ks = jax.random.split(key, 11)
    x_nchw = jax.random.normal(ks[0], (N, C, H, W), jnp.float32)
    w1_oihw = jax.random.normal(ks[1], (C, C, 1, 1), jnp.float32) * 0.05
    w2_oihw = jax.random.normal(ks[2], (C, C, 1, 1), jnp.float32) * 0.05

    params = {
        "w1_oihw": w1_oihw, "w2_oihw": w2_oihw,
        "w1": w1_oihw[:, :, 0, 0].T, "w2": w2_oihw[:, :, 0, 0].T,  # (Cin, Cout)
        "bn1_gamma": jax.random.uniform(ks[3], (C,), minval=0.5, maxval=1.5),
        "bn1_beta":  jax.random.normal(ks[4], (C,)) * 0.1,
        "bn1_mean":  jax.random.normal(ks[5], (C,)) * 0.1,
        "bn1_var":   jax.random.uniform(ks[6], (C,), minval=0.5, maxval=1.5),
        "bn2_gamma": jax.random.uniform(ks[7], (C,), minval=0.5, maxval=1.5),
        "bn2_beta":  jax.random.normal(ks[8], (C,)) * 0.1,
        "bn2_mean":  jax.random.normal(ks[9], (C,)) * 0.1,
        "bn2_var":   jax.random.uniform(ks[10], (C,), minval=0.5, maxval=1.5),
    }

    ref = jax.block_until_ready(reference_forward(x_nchw, params, stride))

    # 1) NHWC hot path (no layout transposes around the kernel); grid = (2,)
    x_nhwc = jnp.transpose(x_nchw, (0, 2, 3, 1))
    out_nhwc = jax.block_until_ready(
        basic_block_forward_nhwc(x_nhwc, params, stride, 1024))
    out = jnp.transpose(out_nhwc, (0, 3, 1, 2)).astype(jnp.float32)

    assert out.shape == ref.shape, (out.shape, ref.shape)
    max_err = float(jnp.max(jnp.abs(out - ref)))
    # bf16 MXU operands + bf16 store (f32 accumulate) -> loosened tolerance
    assert bool(jnp.allclose(out, ref, atol=5e-2, rtol=5e-2)), max_err

    # 2) NCHW module-parity adapter
    out2 = jax.block_until_ready(basic_block_forward(x_nchw, params, stride, 1024))
    out2 = out2.astype(jnp.float32)
    assert out2.shape == ref.shape
    assert bool(jnp.allclose(out2, ref, atol=5e-2, rtol=5e-2)), \
        float(jnp.max(jnp.abs(out2 - ref)))

    print("KERNEL_OK")
</pallas_src>

<mosaic_0001>
module attributes {stable_mosaic.version = 11 : i64} {
  func.func @_fused_block_kernel(%arg0: i32, %arg1: memref<144x128xf32, #tpu.memory_space<vmem>>, %arg2: memref<144x144xbf16, #tpu.memory_space<vmem>>, %arg3: memref<144x1xf32, #tpu.memory_space<vmem>>, %arg4: memref<128x128xbf16, #tpu.memory_space<vmem>>, %arg5: memref<1x128xf32, #tpu.memory_space<vmem>>, %arg6: memref<128x128xbf16, #tpu.memory_space<vmem>>, %arg7: memref<1x128xf32, #tpu.memory_space<vmem>>, %arg8: memref<144x128xbf16, #tpu.memory_space<vmem>>) attributes {dimension_semantics = [#tpu.dimension_semantics<parallel>], iteration_bounds = array<i64: 2>, scalar_prefetch = 0 : i64, scratch_operands = 0 : i64, tpu.core_type = #tpu.core_type<tc>, window_params = [{transform_indices = @transform_0, window_bounds = array<i64: 144, 128>}, {pipeline_mode = #tpu.pipeline_mode<synchronous>, transform_indices = @transform_1, window_bounds = array<i64: 144, 144>}, {pipeline_mode = #tpu.pipeline_mode<synchronous>, transform_indices = @transform_2, window_bounds = array<i64: 144, 1>}, {pipeline_mode = #tpu.pipeline_mode<synchronous>, transform_indices = @transform_3, window_bounds = array<i64: 128, 128>}, {pipeline_mode = #tpu.pipeline_mode<synchronous>, transform_indices = @transform_4, window_bounds = array<i64: 1, 128>}, {pipeline_mode = #tpu.pipeline_mode<synchronous>, transform_indices = @transform_5, window_bounds = array<i64: 128, 128>}, {pipeline_mode = #tpu.pipeline_mode<synchronous>, transform_indices = @transform_6, window_bounds = array<i64: 1, 128>}, {transform_indices = @transform_7, window_bounds = array<i64: 144, 128>}]} {
    %c0 = arith.constant 0 : index
    %c0_0 = arith.constant 0 : index
    %0 = vector.load %arg1[%c0, %c0_0] : memref<144x128xf32, #tpu.memory_space<vmem>>, vector<144x128xf32>
    %1 = arith.truncf %0 : vector<144x128xf32> to vector<144x128xbf16>
    %c0_1 = arith.constant 0 : index
    %c0_2 = arith.constant 0 : index
    %2 = vector.load %arg2[%c0_1, %c0_2] : memref<144x144xbf16, #tpu.memory_space<vmem>>, vector<144x144xbf16>
    %cst = arith.constant dense<0.000000e+00> : vector<144x128xf32>
    %3 = tpu.matmul %2, %1, %cst {dimension_numbers = #tpu.dot_dimension_numbers<[1], [0], [0], [1], [0, 0, 1, 1], [], []>} : vector<144x144xbf16>, vector<144x128xbf16>, vector<144x128xf32> -> vector<144x128xf32>
    %4 = arith.truncf %3 : vector<144x128xf32> to vector<144x128xbf16>
    %c0_3 = arith.constant 0 : index
    %c0_4 = arith.constant 0 : index
    %5 = vector.load %arg4[%c0_3, %c0_4] : memref<128x128xbf16, #tpu.memory_space<vmem>>, vector<128x128xbf16>
    %cst_5 = arith.constant dense<0.000000e+00> : vector<144x128xf32>
    %6 = tpu.matmul %4, %5, %cst_5 {dimension_numbers = #tpu.dot_dimension_numbers<[1], [0], [0], [1], [0, 0, 1, 1], [], []>} : vector<144x128xbf16>, vector<128x128xbf16>, vector<144x128xf32> -> vector<144x128xf32>
    %c0_6 = arith.constant 0 : index
    %c0_7 = arith.constant 0 : index
    %7 = vector.load %arg5[%c0_6, %c0_7] : memref<1x128xf32, #tpu.memory_space<vmem>>, vector<1x128xf32>
    %8 = vector.broadcast %7 : vector<1x128xf32> to vector<144x128xf32>
    %9 = arith.addf %6, %8 : vector<144x128xf32>
    %cst_8 = arith.constant 0.000000e+00 : f32
    %10 = vector.broadcast %cst_8 : f32 to vector<144x128xf32>
    %11 = arith.maximumf %9, %10 : vector<144x128xf32>
    %c0_9 = arith.constant 0 : index
    %c0_10 = arith.constant 0 : index
    %12 = vector.load %arg3[%c0_9, %c0_10] : memref<144x1xf32, #tpu.memory_space<vmem>>, vector<144x1xf32>
    %13 = vector.broadcast %12 : vector<144x1xf32> to vector<144x128xf32>
    %14 = arith.mulf %11, %13 : vector<144x128xf32>
    %15 = arith.truncf %14 : vector<144x128xf32> to vector<144x128xbf16>
    %c0_11 = arith.constant 0 : index
    %c0_12 = arith.constant 0 : index
    %16 = vector.load %arg6[%c0_11, %c0_12] : memref<128x128xbf16, #tpu.memory_space<vmem>>, vector<128x128xbf16>
    %cst_13 = arith.constant dense<0.000000e+00> : vector<144x128xf32>
    %17 = tpu.matmul %15, %16, %cst_13 {dimension_numbers = #tpu.dot_dimension_numbers<[1], [0], [0], [1], [0, 0, 1, 1], [], []>} : vector<144x128xbf16>, vector<128x128xbf16>, vector<144x128xf32> -> vector<144x128xf32>
    %c0_14 = arith.constant 0 : index
    %c0_15 = arith.constant 0 : index
    %18 = vector.load %arg7[%c0_14, %c0_15] : memref<1x128xf32, #tpu.memory_space<vmem>>, vector<1x128xf32>
    %19 = vector.broadcast %18 : vector<1x128xf32> to vector<144x128xf32>
    %20 = arith.addf %17, %19 : vector<144x128xf32>
    %21 = arith.addf %20, %0 : vector<144x128xf32>
    %cst_16 = arith.constant 0.000000e+00 : f32
    %22 = vector.broadcast %cst_16 : f32 to vector<144x128xf32>
    %23 = arith.maximumf %21, %22 : vector<144x128xf32>
    %24 = arith.truncf %23 : vector<144x128xf32> to vector<144x128xbf16>
    %c0_17 = arith.constant 0 : index
    %c0_18 = arith.constant 0 : index
    %25 = vector.load %arg8[%c0_17, %c0_18] : memref<144x128xbf16, #tpu.memory_space<vmem>>, vector<144x128xbf16>
    tpu.vector_store %arg8[%c0_17, %c0_18], %24 {strides = array<i32>} : memref<144x128xbf16, #tpu.memory_space<vmem>>, vector<144x128xbf16>,
    return
  }
  func.func @transform_0(%arg0: i32) -> (i32, i32) {
    %c0_i32 = arith.constant 0 : i32
    %c0_i32_0 = arith.constant 0 : i32
    return %arg0, %c0_i32 : i32, i32
  }
  func.func @transform_1(%arg0: i32) -> (i32, i32) {
    %c0_i32 = arith.constant 0 : i32
    %c0_i32_0 = arith.constant 0 : i32
    %c0_i32_1 = arith.constant 0 : i32
    return %c0_i32, %c0_i32_0 : i32, i32
  }
  func.func @transform_2(%arg0: i32) -> (i32, i32) {
    %c0_i32 = arith.constant 0 : i32
    %c0_i32_0 = arith.constant 0 : i32
    %c0_i32_1 = arith.constant 0 : i32
    return %c0_i32, %c0_i32_0 : i32, i32
  }
  func.func @transform_3(%arg0: i32) -> (i32, i32) {
    %c0_i32 = arith.constant 0 : i32
    %c0_i32_0 = arith.constant 0 : i32
    %c0_i32_1 = arith.constant 0 : i32
    return %c0_i32, %c0_i32_0 : i32, i32
  }
  func.func @transform_4(%arg0: i32) -> (i32, i32) {
    %c0_i32 = arith.constant 0 : i32
    %c0_i32_0 = arith.constant 0 : i32
    %c0_i32_1 = arith.constant 0 : i32
    return %c0_i32, %c0_i32_0 : i32, i32
  }
  func.func @transform_5(%arg0: i32) -> (i32, i32) {
    %c0_i32 = arith.constant 0 : i32
    %c0_i32_0 = arith.constant 0 : i32
    %c0_i32_1 = arith.constant 0 : i32
    return %c0_i32, %c0_i32_0 : i32, i32
  }
  func.func @transform_6(%arg0: i32) -> (i32, i32) {
    %c0_i32 = arith.constant 0 : i32
    %c0_i32_0 = arith.constant 0 : i32
    %c0_i32_1 = arith.constant 0 : i32
    return %c0_i32, %c0_i32_0 : i32, i32
  }
  func.func @transform_7(%arg0: i32) -> (i32, i32) {
    %c0_i32 = arith.constant 0 : i32
    %c0_i32_0 = arith.constant 0 : i32
    return %arg0, %c0_i32 : i32, i32
  }
}

</mosaic_0001>

<llo_original>
// kernel: basic_block_forward_nhwc.1
$region0: #{basic_block_forward_nhwc.1}
  #allocation0 [shape = 'u32[]', space=smem, size = 0x4, offset = 0x4, fixed_abs, tag = 'smem constant byte address 0x4 - core index']
  #allocation1 [shape = 'u32[144,128]{1,0:T(1,128)}', space=vmem, size = 0x12000, scoped, tag = 'internal scratch']
  %s0 = inlined_call_operand.vmem [shape: f32[288,128], index: 0, kind: input, shape index: {}]
  %s1 = inlined_call_operand.vmem [shape: bf16[144,144], index: 1, kind: input, shape index: {}]
  %s2 = inlined_call_operand.vmem [shape: f32[144,1], index: 2, kind: input, shape index: {}]
  %s3 = inlined_call_operand.vmem [shape: bf16[128,128], index: 3, kind: input, shape index: {}]
  %s4 = inlined_call_operand.vmem [shape: f32[1,128], index: 4, kind: input, shape index: {}]
  %s5 = inlined_call_operand.vmem [shape: bf16[128,128], index: 5, kind: input, shape index: {}]
  %s6 = inlined_call_operand.vmem [shape: f32[1,128], index: 6, kind: input, shape index: {}]
  %s7 = inlined_call_operand.vmem [shape: bf16[288,128], index: 7, kind: output, shape index: {}]
  %s8 = sld [smem:[#allocation0]]
  $region61: #{basic_block_forward_nhwc.1} parent=0
    _
  %s10 = ssub.s32 1, %s8
  %s11 = scalar_select 0, %s10, %s8
  loop: start=0, step=1, limit=4
  $region2: #{basic_block_forward_nhwc.1} parent=0 // loop_pre_header
    _
  $region3: #{basic_block_forward_nhwc.1} parent=0 // loop_header
    %s13 = sphi 0, %s17
    %p14 = scmp.ge.s32.totalorder %s13, 4
    %s23 = sphi 0, %s25
    %s26 = sphi 0, %s23
    %s27 = sphi 0, %s26
    %s43 = sphi 0, %s27
    %s47 = sphi 0, %s47
    %s49 = sphi 0, %s47
    %s50 = sphi 0, %s49
    %s64 = sphi 0, %s50
    %s68 = sphi 0, %s68
    %s70 = sphi 0, %s68
    %s71 = sphi 0, %s70
    %s85 = sphi 0, %s71
    %s89 = sphi 0, %s89
    %s91 = sphi 0, %s89
    %s92 = sphi 0, %s91
    %s106 = sphi 0, %s92
    %s110 = sphi 0, %s110
    %s112 = sphi 0, %s110
    %s113 = sphi 0, %s112
    %s127 = sphi 0, %s113
    %s131 = sphi 0, %s131
    %s133 = sphi 0, %s131
    %s134 = sphi 0, %s133
    %s148 = sphi 0, %s134
    %s152 = sphi 0, %s152
    %s154 = sphi 0, %s152
    %s155 = sphi 0, %s154
    %s169 = sphi 0, %s155
    %s175 = sphi 0, %s177
    %s178 = sphi 0, %s175
    %s179 = sphi 0, %s178
    %s195 = sphi 0, %s179
  $region4: #{basic_block_forward_nhwc.1} parent=0 // loop_header_branch
    %16 = sbr.rel (%p14) target = $region8
  $region5: #{basic_block_forward_nhwc.1} parent=0 // loop_body
    %s18 = ssub.s32 %s13, 1
    %s19 = ssub.s32 %s13, 2
    %s20 = sadd.s32 %s13, 1
    %s21 = ssub.s32 %s13, %s20
    %p22 = scmp.eq.s32.totalorder %s21, 0
    %s24 = sadd.s32 %s23, 1
    %s25 = scalar_select %p22, %s23, %s24
    %p28 = pneg %p22
    %p29 = scmp.eq.s32.totalorder %s13, 1
    %p30 = por %p28, %p29
    %p31 = scmp.ne.s32.totalorder %s23, %s26
    %p32 = scmp.eq.s32.totalorder %s13, 0
    %p33 = por %p31, %p32
    %p34 = scmp.ne.s32.totalorder %s23, %s26
    %p35 = scmp.eq.s32.totalorder %s18, 1
    %p36 = por %p34, %p35
    %p37 = scmp.ne.s32.totalorder %s26, %s27
    %p38 = scmp.eq.s32.totalorder %s18, 0
    %p39 = por %p37, %p38
    %p40 = scmp.ne.s32.totalorder %s26, %s27
    %p41 = scmp.eq.s32.totalorder %s19, 1
    %p42 = por %p40, %p41
    %p44 = scmp.ne.s32.totalorder %s27, %s43
    %p45 = scmp.eq.s32.totalorder %s19, 0
    %p46 = por %p44, %p45
    %s48 = sadd.s32 %s47, 1
    %p51 = scmp.eq.s32.totalorder %s13, 1
    %p52 = scmp.ne.s32.totalorder %s47, %s49
    %p53 = scmp.eq.s32.totalorder %s13, 0
    %p54 = por %p52, %p53
    %p55 = scmp.ne.s32.totalorder %s47, %s49
    %p56 = scmp.eq.s32.totalorder %s18, 1
    %p57 = por %p55, %p56
    %p58 = scmp.ne.s32.totalorder %s49, %s50
    %p59 = scmp.eq.s32.totalorder %s18, 0
    %p60 = por %p58, %p59
    %p61 = scmp.ne.s32.totalorder %s49, %s50
    %p62 = scmp.eq.s32.totalorder %s19, 1
    %p63 = por %p61, %p62
    %p65 = scmp.ne.s32.totalorder %s50, %s64
    %p66 = scmp.eq.s32.totalorder %s19, 0
    %p67 = por %p65, %p66
    %s69 = sadd.s32 %s68, 1
    %p72 = scmp.eq.s32.totalorder %s13, 1
    %p73 = scmp.ne.s32.totalorder %s68, %s70
    %p74 = scmp.eq.s32.totalorder %s13, 0
    %p75 = por %p73, %p74
    %p76 = scmp.ne.s32.totalorder %s68, %s70
    %p77 = scmp.eq.s32.totalorder %s18, 1
    %p78 = por %p76, %p77
    %p79 = scmp.ne.s32.totalorder %s70, %s71
    %p80 = scmp.eq.s32.totalorder %s18, 0
    %p81 = por %p79, %p80
    %p82 = scmp.ne.s32.totalorder %s70, %s71
    %p83 = scmp.eq.s32.totalorder %s19, 1
    %p84 = por %p82, %p83
    %p86 = scmp.ne.s32.totalorder %s71, %s85
    %p87 = scmp.eq.s32.totalorder %s19, 0
    %p88 = por %p86, %p87
    %s90 = sadd.s32 %s89, 1
    %p93 = scmp.eq.s32.totalorder %s13, 1
    %p94 = scmp.ne.s32.totalorder %s89, %s91
    %p95 = scmp.eq.s32.totalorder %s13, 0
    %p96 = por %p94, %p95
    %p97 = scmp.ne.s32.totalorder %s89, %s91
    %p98 = scmp.eq.s32.totalorder %s18, 1
    %p99 = por %p97, %p98
    %p100 = scmp.ne.s32.totalorder %s91, %s92
    %p101 = scmp.eq.s32.totalorder %s18, 0
    %p102 = por %p100, %p101
    %p103 = scmp.ne.s32.totalorder %s91, %s92
    %p104 = scmp.eq.s32.totalorder %s19, 1
    %p105 = por %p103, %p104
    %p107 = scmp.ne.s32.totalorder %s92, %s106
    %p108 = scmp.eq.s32.totalorder %s19, 0
    %p109 = por %p107, %p108
    %s111 = sadd.s32 %s110, 1
    %p114 = scmp.eq.s32.totalorder %s13, 1
    %p115 = scmp.ne.s32.totalorder %s110, %s112
    %p116 = scmp.eq.s32.totalorder %s13, 0
    %p117 = por %p115, %p116
    %p118 = scmp.ne.s32.totalorder %s110, %s112
    %p119 = scmp.eq.s32.totalorder %s18, 1
    %p120 = por %p118, %p119
    %p121 = scmp.ne.s32.totalorder %s112, %s113
    %p122 = scmp.eq.s32.totalorder %s18, 0
    %p123 = por %p121, %p122
    %p124 = scmp.ne.s32.totalorder %s112, %s113
    %p125 = scmp.eq.s32.totalorder %s19, 1
    %p126 = por %p124, %p125
    %p128 = scmp.ne.s32.totalorder %s113, %s127
    %p129 = scmp.eq.s32.totalorder %s19, 0
    %p130 = por %p128, %p129
    %s132 = sadd.s32 %s131, 1
    %p135 = scmp.eq.s32.totalorder %s13, 1
    %p136 = scmp.ne.s32.totalorder %s131, %s133
    %p137 = scmp.eq.s32.totalorder %s13, 0
    %p138 = por %p136, %p137
    %p139 = scmp.ne.s32.totalorder %s131, %s133
    %p140 = scmp.eq.s32.totalorder %s18, 1
    %p141 = por %p139, %p140
    %p142 = scmp.ne.s32.totalorder %s133, %s134
    %p143 = scmp.eq.s32.totalorder %s18, 0
    %p144 = por %p142, %p143
    %p145 = scmp.ne.s32.totalorder %s133, %s134
    %p146 = scmp.eq.s32.totalorder %s19, 1
    %p147 = por %p145, %p146
    %p149 = scmp.ne.s32.totalorder %s134, %s148
    %p150 = scmp.eq.s32.totalorder %s19, 0
    %p151 = por %p149, %p150
    %s153 = sadd.s32 %s152, 1
    %p156 = scmp.eq.s32.totalorder %s13, 1
    %p157 = scmp.ne.s32.totalorder %s152, %s154
    %p158 = scmp.eq.s32.totalorder %s13, 0
    %p159 = por %p157, %p158
    %p160 = scmp.ne.s32.totalorder %s152, %s154
    %p161 = scmp.eq.s32.totalorder %s18, 1
    %p162 = por %p160, %p161
    %p163 = scmp.ne.s32.totalorder %s154, %s155
    %p164 = scmp.eq.s32.totalorder %s18, 0
    %p165 = por %p163, %p164
    %p166 = scmp.ne.s32.totalorder %s154, %s155
    %p167 = scmp.eq.s32.totalorder %s19, 1
    %p168 = por %p166, %p167
    %p170 = scmp.ne.s32.totalorder %s155, %s169
    %p171 = scmp.eq.s32.totalorder %s19, 0
    %p172 = por %p170, %p171
    %s173 = ssub.s32 %s13, %s20
    %p174 = scmp.eq.s32.totalorder %s173, 0
    %s176 = sadd.s32 %s175, 1
    %s177 = scalar_select %p174, %s175, %s176
    %p180 = pneg %p174
    %p181 = scmp.eq.s32.totalorder %s13, 1
    %p182 = por %p180, %p181
    %p183 = scmp.ne.s32.totalorder %s175, %s178
    %p184 = scmp.eq.s32.totalorder %s13, 0
    %p185 = por %p183, %p184
    %p186 = scmp.ne.s32.totalorder %s175, %s178
    %p187 = scmp.eq.s32.totalorder %s18, 1
    %p188 = por %p186, %p187
    %p189 = scmp.ne.s32.totalorder %s178, %s179
    %p190 = scmp.eq.s32.totalorder %s18, 0
    %p191 = por %p189, %p190
    %p192 = scmp.ne.s32.totalorder %s178, %s179
    %p193 = scmp.eq.s32.totalorder %s19, 1
    %p194 = por %p192, %p193
    %p196 = scmp.ne.s32.totalorder %s179, %s195
    %p197 = scmp.eq.s32.totalorder %s19, 0
    %p198 = por %p196, %p197
    %p199 = scmp.le.s32.totalorder 1, %s13
    %p200 = scmp.lt.s32.totalorder %s13, 3
    %p201 = pnand %p199, %p200
    %p202 = pneg %p201
    // Predicated region
    $region9: #{basic_block_forward_nhwc.1} parent=5 // pred_check
      _
    $region10: #{basic_block_forward_nhwc.1} parent=5 // pred_check_branch
      %204 = sbr.rel (%p201) target = $region12
    $region11: #{basic_block_forward_nhwc.1} parent=5 // pred_region
      %s205 = ssub.s32 %s13, 1
      // Predicated region
      $region13: #{basic_block_forward_nhwc.1} parent=11 // pred_check
        %p206 = pneg %p60
      $region14: #{basic_block_forward_nhwc.1} parent=11 // pred_check_branch
        %208 = sbr.rel (%p206) target = $region16
      $region15: #{basic_block_forward_nhwc.1} parent=11 // pred_region
        _
      $region16: #{basic_block_forward_nhwc.1} parent=11 // pred_fallthru
        _
      // Predicated region
      $region17: #{basic_block_forward_nhwc.1} parent=11 // pred_check
        %p209 = pneg %p81
      $region18: #{basic_block_forward_nhwc.1} parent=11 // pred_check_branch
        %211 = sbr.rel (%p209) target = $region20
      $region19: #{basic_block_forward_nhwc.1} parent=11 // pred_region
        _
      $region20: #{basic_block_forward_nhwc.1} parent=11 // pred_fallthru
        _
      // Predicated region
      $region21: #{basic_block_forward_nhwc.1} parent=11 // pred_check
        %p212 = pneg %p102
      $region22: #{basic_block_forward_nhwc.1} parent=11 // pred_check_branch
        %214 = sbr.rel (%p212) target = $region24
      $region23: #{basic_block_forward_nhwc.1} parent=11 // pred_region
        _
      $region24: #{basic_block_forward_nhwc.1} parent=11 // pred_fallthru
        _
      // Predicated region
      $region25: #{basic_block_forward_nhwc.1} parent=11 // pred_check
        %p215 = pneg %p123
      $region26: #{basic_block_forward_nhwc.1} parent=11 // pred_check_branch
        %217 = sbr.rel (%p215) target = $region28
      $region27: #{basic_block_forward_nhwc.1} parent=11 // pred_region
        _
      $region28: #{basic_block_forward_nhwc.1} parent=11 // pred_fallthru
        _
      // Predicated region
      $region29: #{basic_block_forward_nhwc.1} parent=11 // pred_check
        %p218 = pneg %p144
      $region30: #{basic_block_forward_nhwc.1} parent=11 // pred_check_branch
        %220 = sbr.rel (%p218) target = $region32
      $region31: #{basic_block_forward_nhwc.1} parent=11 // pred_region
        _
      $region32: #{basic_block_forward_nhwc.1} parent=11 // pred_fallthru
        _
      // Predicated region
      $region33: #{basic_block_forward_nhwc.1} parent=11 // pred_check
        %p221 = pneg %p165
      $region34: #{basic_block_forward_nhwc.1} parent=11 // pred_check_branch
        %223 = sbr.rel (%p221) target = $region36
      $region35: #{basic_block_forward_nhwc.1} parent=11 // pred_region
        _
      $region36: #{basic_block_forward_nhwc.1} parent=11 // pred_fallthru
        _
    $region12: #{basic_block_forward_nhwc.1} parent=5 // pred_fallthru
      _
    %p224 = scmp.lt.s32.totalorder %s13, 2
    // Predicated region
    $region37: #{basic_block_forward_nhwc.1} parent=5 // pred_check
      %p225 = pneg %p224
    $region38: #{basic_block_forward_nhwc.1} parent=5 // pred_check_branch
      %227 = sbr.rel (%p225) target = $region40
    $region39: #{basic_block_forward_nhwc.1} parent=5 // pred_region
      // Predicated region
      $region41: #{basic_block_forward_nhwc.1} parent=39 // pred_check
        %p228 = pneg %p33
      $region42: #{basic_block_forward_nhwc.1} parent=39 // pred_check_branch
        %230 = sbr.rel (%p228) target = $region44
      $region43: #{basic_block_forward_nhwc.1} parent=39 // pred_region
        %s231 = smul.u32 18, %s13
        %p232 = scmp.lt.s32.totalorder %s231, 35
        %s233 = scalar_select %p232, %s231, 35
        %s234 = smul.addr %s233, 8
        %s235 = scalar_lea.vmem %s0, %s234
        %s236 = smul.u32 18, %s13
      $region44: #{basic_block_forward_nhwc.1} parent=39 // pred_fallthru
        _
    $region40: #{basic_block_forward_nhwc.1} parent=5 // pred_fallthru
      _
    %p237 = scmp.le.s32.totalorder 1, %s13
    %p238 = scmp.lt.s32.totalorder %s13, 3
    %p239 = pnand %p237, %p238
    %p240 = pneg %p239
    // Predicated region
    $region45: #{basic_block_forward_nhwc.1} parent=5 // pred_check
      _
    $region46: #{basic_block_forward_nhwc.1} parent=5 // pred_check_branch
      %242 = sbr.rel (%p239) target = $region48
    $region47: #{basic_block_forward_nhwc.1} parent=5 // pred_region
      %s243 = ssub.s32 %s13, 1
      %s244 = smul.u32 18, %s18
      %p245 = scmp.lt.s32.totalorder %s244, 35
      %s246 = scalar_select %p245, %s244, 35
      %s247 = smul.addr %s246, 8
      %s248 = scalar_lea.vmem %s0, %s247
      %p249 = pneg %p39
      %p250 = pneg %p36
      %p251 = pneg %p60
      %p252 = pneg %p57
      %p253 = pneg %p81
      %p254 = pneg %p78
      %p255 = pneg %p102
      %p256 = pneg %p99
      %p257 = pneg %p123
      %p258 = pneg %p120
      %p259 = pneg %p144
      %p260 = pneg %p141
      %p261 = pneg %p165
      %p262 = pneg %p162
      %p263 = pneg %p191
      %p264 = pneg %p188
      %s265 = smul.u32 18, %s18
      %p266 = scmp.lt.s32.totalorder %s265, 35
      %s267 = scalar_select %p266, %s265, 35
      %s268 = smul.addr %s267, 4
      %s269 = scalar_lea.vmem %s7, %s268
      %s270 = smul.u32 18, %s18
      %p271 = scmp.lt.s32.totalorder %s270, 35
      %s272 = scalar_select %p271, %s270, 35
      %s273 = smul.addr %s272, 8
      %s274 = scalar_lea.vmem %s0, %s273
      %s275 = smul.u32 18, %s18
      %s276 = smul.u32 18, %s18
      %p277 = scmp.lt.s32.totalorder %s276, 35
      %s278 = scalar_select %p277, %s276, 35
      %s279 = smul.addr %s278, 4
      %s280 = scalar_lea.vmem %s7, %s279
      %s281 = smul.u32 18, %s18
      %v283 = vld [vmem:[%s274] sm:$0xff]
      %v284 = vld [vmem:[%s274 + $0x8] sm:$0xff]
      %v285 = vld [vmem:[%s274 + $0x10] sm:$0xff]
      %v286 = vld [vmem:[%s274 + $0x18] sm:$0xff]
      %v287 = vld [vmem:[%s274 + $0x20] sm:$0xff]
      %v288 = vld [vmem:[%s274 + $0x28] sm:$0xff]
      %v289 = vld [vmem:[%s274 + $0x30] sm:$0xff]
      %v290 = vld [vmem:[%s274 + $0x38] sm:$0xff]
      %v291 = vld [vmem:[%s274 + $0x40] sm:$0xff]
      %v292 = vld [vmem:[%s274 + $0x48] sm:$0xff]
      %v293 = vld [vmem:[%s274 + $0x50] sm:$0xff]
      %v294 = vld [vmem:[%s274 + $0x58] sm:$0xff]
      %v295 = vld [vmem:[%s274 + $0x60] sm:$0xff]
      %v296 = vld [vmem:[%s274 + $0x68] sm:$0xff]
      %v297 = vld [vmem:[%s274 + $0x70] sm:$0xff]
      %v298 = vld [vmem:[%s274 + $0x78] sm:$0xff]
      %v299 = vld [vmem:[%s274 + $0x80] sm:$0xff]
      %v300 = vld [vmem:[%s274 + $0x88] sm:$0xff]
      %v301 = vpack.c.bf16 %v284, %v283
      %v302 = vpack.c.bf16 %v286, %v285
      %v303 = vpack.c.bf16 %v288, %v287
      %v304 = vpack.c.bf16 %v290, %v289
      %v305 = vpack.c.bf16 %v292, %v291
      %v306 = vpack.c.bf16 %v294, %v293
      %v307 = vpack.c.bf16 %v296, %v295
      %v308 = vpack.c.bf16 %v298, %v297
      %v309 = vpack.c.bf16 %v300, %v299
      %v310 = vld [vmem:[%s1] sm:$0xff]
      %v311 = vld [vmem:[%s1 + $0x8] sm:$0xff]
      %v312 = vld [vmem:[%s1 + $0x10] sm:$0xff]
      %v313 = vld [vmem:[%s1 + $0x18] sm:$0xff]
      %v314 = vld [vmem:[%s1 + $0x20] sm:$0xff]
      %v315 = vld [vmem:[%s1 + $0x28] sm:$0xff]
      %v316 = vld [vmem:[%s1 + $0x30] sm:$0xff]
      %v317 = vld [vmem:[%s1 + $0x38] sm:$0xff]
      %v318 = vld [vmem:[%s1 + $0x40] sm:$0xff]
      %v319 = vld [vmem:[%s1 + $0x48] sm:$0xff]
      %v320 = vld [vmem:[%s1 + $0x50] sm:$0xff]
      %v321 = vld [vmem:[%s1 + $0x58] sm:$0xff]
      %v322 = vld [vmem:[%s1 + $0x60] sm:$0xff]
      %v323 = vld [vmem:[%s1 + $0x68] sm:$0xff]
      %v324 = vld [vmem:[%s1 + $0x70] sm:$0xff]
      %v325 = vld [vmem:[%s1 + $0x78] sm:$0xff]
      %v326 = vld [vmem:[%s1 + $0x80] sm:$0xff]
      %v327 = vld [vmem:[%s1 + $0x88] sm:$0xff]
      %v346 = vunpack.c.l.b16 %v310
      %v347 = vunpack.c.h.b16 %v310
      %v348 = vunpack.c.l.b16 %v311
      %v349 = vunpack.c.h.b16 %v311
      %v350 = vunpack.c.l.b16 %v312
      %v351 = vunpack.c.h.b16 %v312
      %v352 = vunpack.c.l.b16 %v313
      %v353 = vunpack.c.h.b16 %v313
      %v354 = vunpack.c.l.b16 %v314
      %v355 = vunpack.c.h.b16 %v314
      %v356 = vunpack.c.l.b16 %v315
      %v357 = vunpack.c.h.b16 %v315
      %v358 = vunpack.c.l.b16 %v316
      %v359 = vunpack.c.h.b16 %v316
      %v360 = vunpack.c.l.b16 %v317
      %v361 = vunpack.c.h.b16 %v317
      %v362 = vunpack.c.l.b16 %v318
      %v363 = vunpack.c.h.b16 %v318
      %v364 = vunpack.c.l.b16 %v319
      %v365 = vunpack.c.h.b16 %v319
      %v366 = vunpack.c.l.b16 %v320
      %v367 = vunpack.c.h.b16 %v320
      %v368 = vunpack.c.l.b16 %v321
      %v369 = vunpack.c.h.b16 %v321
      %v370 = vunpack.c.l.b16 %v322
      %v371 = vunpack.c.h.b16 %v322
      %v372 = vunpack.c.l.b16 %v323
      %v373 = vunpack.c.h.b16 %v323
      %v374 = vunpack.c.l.b16 %v324
      %v375 = vunpack.c.h.b16 %v324
      %v376 = vunpack.c.l.b16 %v325
      %v377 = vunpack.c.h.b16 %v325
      %v378 = vunpack.c.l.b16 %v326
      %v379 = vunpack.c.h.b16 %v326
      %v380 = vunpack.c.l.b16 %v327
      %v381 = vunpack.c.h.b16 %v327
      %v382 = vpack.c.b16 %v348, %v346
      %v383 = vpack.c.b16 %v349, %v347
      %v384 = vpack.c.b16 %v352, %v350
      %v385 = vpack.c.b16 %v353, %v351
      %v386 = vpack.c.b16 %v356, %v354
      %v387 = vpack.c.b16 %v357, %v355
      %v388 = vpack.c.b16 %v360, %v358
      %v389 = vpack.c.b16 %v361, %v359
      %v390 = vpack.c.b16 %v364, %v362
      %v391 = vpack.c.b16 %v365, %v363
      %v392 = vpack.c.b16 %v368, %v366
      %v393 = vpack.c.b16 %v369, %v367
      %v394 = vpack.c.b16 %v372, %v370
      %v395 = vpack.c.b16 %v373, %v371
      %v396 = vpack.c.b16 %v376, %v374
      %v397 = vpack.c.b16 %v377, %v375
      %v398 = vpack.c.b16 %v380, %v378
      %v399 = vpack.c.b16 %v381, %v379
      %vm409 = vcmask 130048
      %v411 = vsel %vm409, %v383, 0
      %v414 = vsel %vm409, %v385, 0
      %v417 = vsel %vm409, %v387, 0
      %v420 = vsel %vm409, %v389, 0
      %v423 = vsel %vm409, %v391, 0
      %v426 = vsel %vm409, %v393, 0
      %v429 = vsel %vm409, %v395, 0
      %v432 = vsel %vm409, %v397, 0
      %v435 = vsel %vm409, %v399, 0
      %437 = vmatprep.subr.bf16.mxu0 0
      %438 = vmatpush1.bf16.msra.mxu0 %v301
      %439 = vmatprep.subr.bf16.mxu0 0
      %440 = vmatpush1.bf16.msra.mxu0 %v302
      %441 = vmatprep.subr.bf16.mxu0 0
      %442 = vmatpush1.bf16.msra.mxu0 %v303
      %443 = vmatprep.subr.bf16.mxu0 0
      %444 = vmatpush1.bf16.msra.mxu0 %v304
      %445 = vmatprep.subr.bf16.mxu0 0
      %446 = vmatpush1.bf16.msra.mxu0 %v305
      %447 = vmatprep.subr.bf16.mxu0 0
      %448 = vmatpush1.bf16.msra.mxu0 %v306
      %449 = vmatprep.subr.bf16.mxu0 0
      %450 = vmatpush1.bf16.msra.mxu0 %v307
      %451 = vmatprep.subr.bf16.mxu0 0
      %452 = vmatpush1.bf16.msra.mxu0 %v308
      %453 = vmatprep.subr.bf16.mxu0 0
      %454 = vmatpush1.bf16.msra.mxu0 %v309
      %455 = vmatprep.subr.bf16.mxu0 0
      %456 = vmatpush1.bf16.msra.mxu0 0
      %457 = vmatprep.subr.bf16.mxu0 0
      %458 = vmatpush1.bf16.msra.mxu0 0
      %459 = vmatprep.subr.bf16.mxu0 0
      %460 = vmatpush1.bf16.msra.mxu0 0
      %461 = vmatprep.subr.bf16.mxu0 0
      %462 = vmatpush1.bf16.msra.mxu0 0
      %463 = vmatprep.subr.bf16.mxu0 0
      %464 = vmatpush1.bf16.msra.mxu0 0
      %465 = vmatprep.subr.bf16.mxu0 0
      %466 = vmatpush1.bf16.msra.mxu0 0
      %467 = vmatprep.subr.bf16.mxu0 0
      %468 = vmatpush1.bf16.msra.mxu0 0
      %469 = vmatprep.mubr.bf16.mxu0 %v411
      %470 = vmatmul.mubr.bf16.gmra.mrb[0].mxu0 %v382
      %v471 = vpop.f32.mrb[0].mxu0
      %v472 = vadd.f32 0.0, %v471
      %v473 = vpop.f32.mrb[0].mxu0
      %v474 = vpop.f32.mrb[0].mxu0
      %v475 = vadd.f32 0.0, %v474
      %v476 = vpop.f32.mrb[0].mxu0
      %477 = vmatprep.mubr.bf16.mxu0 %v414
      %478 = vmatmul.mubr.bf16.gmra.mrb[0].mxu0 %v384
      %v479 = vpop.f32.mrb[0].mxu0
      %v480 = vadd.f32 0.0, %v479
      %v481 = vpop.f32.mrb[0].mxu0
      %v482 = vpop.f32.mrb[0].mxu0
      %v483 = vadd.f32 0.0, %v482
      %v484 = vpop.f32.mrb[0].mxu0
      %485 = vmatprep.mubr.bf16.mxu0 %v417
      %486 = vmatmul.mubr.bf16.gmra.mrb[0].mxu0 %v386
      %v487 = vpop.f32.mrb[0].mxu0
      %v488 = vadd.f32 0.0, %v487
      %v489 = vpop.f32.mrb[0].mxu0
      %v490 = vpop.f32.mrb[0].mxu0
      %v491 = vadd.f32 0.0, %v490
      %v492 = vpop.f32.mrb[0].mxu0
      %493 = vmatprep.mubr.bf16.mxu0 %v420
      %494 = vmatmul.mubr.bf16.gmra.mrb[0].mxu0 %v388
      %v495 = vpop.f32.mrb[0].mxu0
      %v496 = vadd.f32 0.0, %v495
      %v497 = vpop.f32.mrb[0].mxu0
      %v498 = vpop.f32.mrb[0].mxu0
      %v499 = vadd.f32 0.0, %v498
      %v500 = vpop.f32.mrb[0].mxu0
      %501 = vmatprep.mubr.bf16.mxu0 %v423
      %502 = vmatmul.mubr.bf16.gmra.mrb[0].mxu0 %v390
      %v503 = vpop.f32.mrb[0].mxu0
      %v504 = vadd.f32 0.0, %v503
      %v505 = vpop.f32.mrb[0].mxu0
      %v506 = vpop.f32.mrb[0].mxu0
      %v507 = vadd.f32 0.0, %v506
      %v508 = vpop.f32.mrb[0].mxu0
      %509 = vmatprep.mubr.bf16.mxu0 %v426
      %510 = vmatmul.mubr.bf16.gmra.mrb[0].mxu0 %v392
      %v511 = vpop.f32.mrb[0].mxu0
      %v512 = vadd.f32 0.0, %v511
      %v513 = vpop.f32.mrb[0].mxu0
      %v514 = vpop.f32.mrb[0].mxu0
      %v515 = vadd.f32 0.0, %v514
      %v516 = vpop.f32.mrb[0].mxu0
      %517 = vmatprep.mubr.bf16.mxu0 %v429
      %518 = vmatmul.mubr.bf16.gmra.mrb[0].mxu0 %v394
      %v519 = vpop.f32.mrb[0].mxu0
      %v520 = vadd.f32 0.0, %v519
      %v521 = vpop.f32.mrb[0].mxu0
      %v522 = vpop.f32.mrb[0].mxu0
      %v523 = vadd.f32 0.0, %v522
      %v524 = vpop.f32.mrb[0].mxu0
      %525 = vmatprep.mubr.bf16.mxu0 %v432
      %526 = vmatmul.mubr.bf16.gmra.mrb[0].mxu0 %v396
      %v527 = vpop.f32.mrb[0].mxu0
      %v528 = vadd.f32 0.0, %v527
      %v529 = vpop.f32.mrb[0].mxu0
      %v530 = vpop.f32.mrb[0].mxu0
      %v531 = vadd.f32 0.0, %v530
      %v532 = vpop.f32.mrb[0].mxu0
      %533 = vmatprep.mubr.bf16.mxu0 %v435
      %534 = vmatmul.mubr.bf16.gmra.mrb[0].mxu0 %v398
      %v535 = vpop.f32.mrb[0].mxu0
      %v536 = vadd.f32 0.0, %v535
      %v537 = vpop.f32.mrb[0].mxu0
      %v538 = vpop.f32.mrb[0].mxu0
      %v539 = vadd.f32 0.0, %v538
      %v540 = vpop.f32.mrb[0].mxu0
      %541 = vdwg.mxu0
      %v542 = vpack.c.bf16 %v475, %v472
      %v543 = vpack.c.bf16 %v483, %v480
      %v544 = vpack.c.bf16 %v491, %v488
      %v545 = vpack.c.bf16 %v499, %v496
      %v546 = vpack.c.bf16 %v507, %v504
      %v547 = vpack.c.bf16 %v515, %v512
      %v548 = vpack.c.bf16 %v523, %v520
      %v549 = vpack.c.bf16 %v531, %v528
      %v550 = vpack.c.bf16 %v539, %v536
      %v551 = vld [vmem:[%s3] sm:$0xf]
      %v552 = vld [vmem:[%s3 + $0x4] sm:$0xf]
      %v553 = vld [vmem:[%s3 + $0x8] sm:$0xf]
      %v554 = vld [vmem:[%s3 + $0xc] sm:$0xf]
      %v555 = vld [vmem:[%s3 + $0x10] sm:$0xf]
      %v556 = vld [vmem:[%s3 + $0x14] sm:$0xf]
      %v557 = vld [vmem:[%s3 + $0x18] sm:$0xf]
      %v558 = vld [vmem:[%s3 + $0x1c] sm:$0xf]
      %v559 = vld [vmem:[%s3 + $0x20] sm:$0xf]
      %v560 = vld [vmem:[%s3 + $0x24] sm:$0xf]
      %v561 = vld [vmem:[%s3 + $0x28] sm:$0xf]
      %v562 = vld [vmem:[%s3 + $0x2c] sm:$0xf]
      %v563 = vld [vmem:[%s3 + $0x30] sm:$0xf]
      %v564 = vld [vmem:[%s3 + $0x34] sm:$0xf]
      %v565 = vld [vmem:[%s3 + $0x38] sm:$0xf]
      %v566 = vld [vmem:[%s3 + $0x3c] sm:$0xf]
      %v567 = vld [vmem:[%s4] sm:$0x1]
      %v569 = vlaneseq
      %v570 = vshrl.u32 %v569, 7
      %v571 = vsub.s32 0, %v570
      %v572 = vrot.slane %v567, %v571
      %v590 = vunpack.c.l.b16 %v551
      %v591 = vunpack.c.l.b16 %v552
      %v592 = vunpack.c.l.b16 %v553
      %v593 = vunpack.c.l.b16 %v554
      %v594 = vunpack.c.l.b16 %v555
      %v595 = vunpack.c.l.b16 %v556
      %v596 = vunpack.c.l.b16 %v557
      %v597 = vunpack.c.l.b16 %v558
      %v598 = vunpack.c.l.b16 %v559
      %v599 = vunpack.c.l.b16 %v560
      %v600 = vunpack.c.l.b16 %v561
      %v601 = vunpack.c.l.b16 %v562
      %v602 = vunpack.c.l.b16 %v563
      %v603 = vunpack.c.l.b16 %v564
      %v604 = vunpack.c.l.b16 %v565
      %v605 = vunpack.c.l.b16 %v566
      %v606 = vpack.c.b16 %v591, %v590
      %v607 = vpack.c.b16 %v593, %v592
      %v608 = vpack.c.b16 %v595, %v594
      %v609 = vpack.c.b16 %v597, %v596
      %v610 = vpack.c.b16 %v599, %v598
      %v611 = vpack.c.b16 %v601, %v600
      %v612 = vpack.c.b16 %v603, %v602
      %v613 = vpack.c.b16 %v605, %v604
      %622 = vmatprep.subr.bf16.mxu0 0
      %623 = vmatpush1.bf16.msra.mxu0 %v606
      %624 = vmatprep.subr.bf16.mxu0 0
      %625 = vmatpush1.bf16.msra.mxu0 %v607
      %626 = vmatprep.subr.bf16.mxu0 0
      %627 = vmatpush1.bf16.msra.mxu0 %v608
      %628 = vmatprep.subr.bf16.mxu0 0
      %629 = vmatpush1.bf16.msra.mxu0 %v609
      %630 = vmatprep.subr.bf16.mxu0 0
      %631 = vmatpush1.bf16.msra.mxu0 %v610
      %632 = vmatprep.subr.bf16.mxu0 0
      %633 = vmatpush1.bf16.msra.mxu0 %v611
      %634 = vmatprep.subr.bf16.mxu0 0
      %635 = vmatpush1.bf16.msra.mxu0 %v612
      %636 = vmatprep.subr.bf16.mxu0 0
      %637 = vmatpush1.bf16.msra.mxu0 %v613
      %638 = vmatprep.subr.bf16.mxu0 0
      %639 = vmatpush1.bf16.msra.mxu0 0
      %640 = vmatprep.subr.bf16.mxu0 0
      %641 = vmatpush1.bf16.msra.mxu0 0
      %642 = vmatprep.subr.bf16.mxu0 0
      %643 = vmatpush1.bf16.msra.mxu0 0
      %644 = vmatprep.subr.bf16.mxu0 0
      %645 = vmatpush1.bf16.msra.mxu0 0
      %646 = vmatprep.subr.bf16.mxu0 0
      %647 = vmatpush1.bf16.msra.mxu0 0
      %648 = vmatprep.subr.bf16.mxu0 0
      %649 = vmatpush1.bf16.msra.mxu0 0
      %650 = vmatprep.subr.bf16.mxu0 0
      %651 = vmatpush1.bf16.msra.mxu0 0
      %652 = vmatprep.subr.bf16.mxu0 0
      %653 = vmatpush1.bf16.msra.mxu0 0
      %654 = vmatprep.mubr.bf16.mxu0 0
      %655 = vmatmul.mubr.bf16.gmra.mrb[0].mxu0 %v542
      %v656 = vpop.f32.mrb[0].mxu0
      %v657 = vadd.f32 %v572, %v656
      %v658 = vpop.f32.mrb[0].mxu0
      %v659 = vpop.f32.mrb[0].mxu0
      %v660 = vadd.f32 %v572, %v659
      %v661 = vpop.f32.mrb[0].mxu0
      %662 = vmatprep.mubr.bf16.mxu0 0
      %663 = vmatmul.mubr.bf16.gmra.mrb[0].mxu0 %v543
      %v664 = vpop.f32.mrb[0].mxu0
      %v665 = vadd.f32 %v572, %v664
      %v666 = vpop.f32.mrb[0].mxu0
      %v667 = vpop.f32.mrb[0].mxu0
      %v668 = vadd.f32 %v572, %v667
      %v669 = vpop.f32.mrb[0].mxu0
      %670 = vmatprep.mubr.bf16.mxu0 0
      %671 = vmatmul.mubr.bf16.gmra.mrb[0].mxu0 %v544
      %v672 = vpop.f32.mrb[0].mxu0
      %v673 = vadd.f32 %v572, %v672
      %v674 = vpop.f32.mrb[0].mxu0
      %v675 = vpop.f32.mrb[0].mxu0
      %v676 = vadd.f32 %v572, %v675
      %v677 = vpop.f32.mrb[0].mxu0
      %678 = vmatprep.mubr.bf16.mxu0 0
      %679 = vmatmul.mubr.bf16.gmra.mrb[0].mxu0 %v545
      %v680 = vpop.f32.mrb[0].mxu0
      %v681 = vadd.f32 %v572, %v680
      %v682 = vpop.f32.mrb[0].mxu0
      %v683 = vpop.f32.mrb[0].mxu0
      %v684 = vadd.f32 %v572, %v683
      %v685 = vpop.f32.mrb[0].mxu0
      %686 = vmatprep.mubr.bf16.mxu0 0
      %687 = vmatmul.mubr.bf16.gmra.mrb[0].mxu0 %v546
      %v688 = vpop.f32.mrb[0].mxu0
      %v689 = vadd.f32 %v572, %v688
      %v690 = vpop.f32.mrb[0].mxu0
      %v691 = vpop.f32.mrb[0].mxu0
      %v692 = vadd.f32 %v572, %v691
      %v693 = vpop.f32.mrb[0].mxu0
      %694 = vmatprep.mubr.bf16.mxu0 0
      %695 = vmatmul.mubr.bf16.gmra.mrb[0].mxu0 %v547
      %v696 = vpop.f32.mrb[0].mxu0
      %v697 = vadd.f32 %v572, %v696
      %v698 = vpop.f32.mrb[0].mxu0
      %v699 = vpop.f32.mrb[0].mxu0
      %v700 = vadd.f32 %v572, %v699
      %v701 = vpop.f32.mrb[0].mxu0
      %702 = vmatprep.mubr.bf16.mxu0 0
      %703 = vmatmul.mubr.bf16.gmra.mrb[0].mxu0 %v548
      %v704 = vpop.f32.mrb[0].mxu0
      %v705 = vadd.f32 %v572, %v704
      %v706 = vpop.f32.mrb[0].mxu0
      %v707 = vpop.f32.mrb[0].mxu0
      %v708 = vadd.f32 %v572, %v707
      %v709 = vpop.f32.mrb[0].mxu0
      %710 = vmatprep.mubr.bf16.mxu0 0
      %711 = vmatmul.mubr.bf16.gmra.mrb[0].mxu0 %v549
      %v712 = vpop.f32.mrb[0].mxu0
      %v713 = vadd.f32 %v572, %v712
      %v714 = vpop.f32.mrb[0].mxu0
      %v715 = vpop.f32.mrb[0].mxu0
      %v716 = vadd.f32 %v572, %v715
      %v717 = vpop.f32.mrb[0].mxu0
      %718 = vmatprep.mubr.bf16.mxu0 0
      %719 = vmatmul.mubr.bf16.gmra.mrb[0].mxu0 %v550
      %v720 = vpop.f32.mrb[0].mxu0
      %v721 = vadd.f32 %v572, %v720
      %v722 = vpop.f32.mrb[0].mxu0
      %v723 = vpop.f32.mrb[0].mxu0
      %v724 = vadd.f32 %v572, %v723
      %v725 = vpop.f32.mrb[0].mxu0
      %726 = vdwg.mxu0
      %v727 = vmax.f32 %v657, 0.0
      %v728 = vmax.f32 %v660, 0.0
      %v729 = vmax.f32 %v665, 0.0
      %v730 = vmax.f32 %v668, 0.0
      %v731 = vmax.f32 %v673, 0.0
      %v732 = vmax.f32 %v676, 0.0
      %v733 = vmax.f32 %v681, 0.0
      %v734 = vmax.f32 %v684, 0.0
      %v735 = vmax.f32 %v689, 0.0
      %v736 = vmax.f32 %v692, 0.0
      %v737 = vmax.f32 %v697, 0.0
      %v738 = vmax.f32 %v700, 0.0
      %v739 = vmax.f32 %v705, 0.0
      %v740 = vmax.f32 %v708, 0.0
      %v741 = vmax.f32 %v713, 0.0
      %v742 = vmax.f32 %v716, 0.0
      %v743 = vmax.f32 %v721, 0.0
      %v744 = vmax.f32 %v724, 0.0
      %v745 = vld [vmem:[%s2] sm:$0xff]
      %v746 = vld [vmem:[%s2 + $0x8] sm:$0xff]
      %v747 = vld [vmem:[%s2 + $0x10] sm:$0xff]
      %v748 = vld [vmem:[%s2 + $0x18] sm:$0xff]
      %v749 = vld [vmem:[%s2 + $0x20] sm:$0xff]
      %v750 = vld [vmem:[%s2 + $0x28] sm:$0xff]
      %v751 = vld [vmem:[%s2 + $0x30] sm:$0xff]
      %v752 = vld [vmem:[%s2 + $0x38] sm:$0xff]
      %v753 = vld [vmem:[%s2 + $0x40] sm:$0xff]
      %v754 = vld [vmem:[%s2 + $0x48] sm:$0xff]
      %v755 = vld [vmem:[%s2 + $0x50] sm:$0xff]
      %v756 = vld [vmem:[%s2 + $0x58] sm:$0xff]
      %v757 = vld [vmem:[%s2 + $0x60] sm:$0xff]
      %v758 = vld [vmem:[%s2 + $0x68] sm:$0xff]
      %v759 = vld [vmem:[%s2 + $0x70] sm:$0xff]
      %v760 = vld [vmem:[%s2 + $0x78] sm:$0xff]
      %v761 = vld [vmem:[%s2 + $0x80] sm:$0xff]
      %v762 = vld [vmem:[%s2 + $0x88] sm:$0xff]
      %764 = vset.pattern.permute.xlu0 0
      %765 = vperm.xlu0 %764, %v745
      %v766 = vpop.permute.xlu0 %765
      %769 = vset.pattern.permute.xlu0 0
      %770 = vperm.xlu0 %769, %v746
      %v771 = vpop.permute.xlu0 %770
      %774 = vset.pattern.permute.xlu0 0
      %775 = vperm.xlu0 %774, %v747
      %v776 = vpop.permute.xlu0 %775
      %779 = vset.pattern.permute.xlu0 0
      %780 = vperm.xlu0 %779, %v748
      %v781 = vpop.permute.xlu0 %780
      %784 = vset.pattern.permute.xlu0 0
      %785 = vperm.xlu0 %784, %v749
      %v786 = vpop.permute.xlu0 %785
      %789 = vset.pattern.permute.xlu0 0
      %790 = vperm.xlu0 %789, %v750
      %v791 = vpop.permute.xlu0 %790
      %794 = vset.pattern.permute.xlu0 0
      %795 = vperm.xlu0 %794, %v751
      %v796 = vpop.permute.xlu0 %795
      %799 = vset.pattern.permute.xlu0 0
      %800 = vperm.xlu0 %799, %v752
      %v801 = vpop.permute.xlu0 %800
      %804 = vset.pattern.permute.xlu0 0
      %805 = vperm.xlu0 %804, %v753
      %v806 = vpop.permute.xlu0 %805
      %809 = vset.pattern.permute.xlu0 0
      %810 = vperm.xlu0 %809, %v754
      %v811 = vpop.permute.xlu0 %810
      %814 = vset.pattern.permute.xlu0 0
      %815 = vperm.xlu0 %814, %v755
      %v816 = vpop.permute.xlu0 %815
      %819 = vset.pattern.permute.xlu0 0
      %820 = vperm.xlu0 %819, %v756
      %v821 = vpop.permute.xlu0 %820
      %824 = vset.pattern.permute.xlu0 0
      %825 = vperm.xlu0 %824, %v757
      %v826 = vpop.permute.xlu0 %825
      %829 = vset.pattern.permute.xlu0 0
      %830 = vperm.xlu0 %829, %v758
      %v831 = vpop.permute.xlu0 %830
      %834 = vset.pattern.permute.xlu0 0
      %835 = vperm.xlu0 %834, %v759
      %v836 = vpop.permute.xlu0 %835
      %839 = vset.pattern.permute.xlu0 0
      %840 = vperm.xlu0 %839, %v760
      %v841 = vpop.permute.xlu0 %840
      %844 = vset.pattern.permute.xlu0 0
      %845 = vperm.xlu0 %844, %v761
      %v846 = vpop.permute.xlu0 %845
      %849 = vset.pattern.permute.xlu0 0
      %850 = vperm.xlu0 %849, %v762
      %v851 = vpop.permute.xlu0 %850
      %v853 = vmul.f32 %v727, %v766
      %v854 = vmul.f32 %v728, %v771
      %v855 = vmul.f32 %v729, %v776
      %v856 = vmul.f32 %v730, %v781
      %v857 = vmul.f32 %v731, %v786
      %v858 = vmul.f32 %v732, %v791
      %v859 = vmul.f32 %v733, %v796
      %v860 = vmul.f32 %v734, %v801
      %v861 = vmul.f32 %v735, %v806
      %v862 = vmul.f32 %v736, %v811
      %v863 = vmul.f32 %v737, %v816
      %v864 = vmul.f32 %v738, %v821
      %v865 = vmul.f32 %v739, %v826
      %v866 = vmul.f32 %v740, %v831
      %v867 = vmul.f32 %v741, %v836
      %v868 = vmul.f32 %v742, %v841
      %v869 = vmul.f32 %v743, %v846
      %v870 = vmul.f32 %v744, %v851
      %v871 = vpack.c.bf16 %v854, %v853
      %v872 = vpack.c.bf16 %v856, %v855
      %v873 = vpack.c.bf16 %v858, %v857
      %v874 = vpack.c.bf16 %v860, %v859
      %v875 = vpack.c.bf16 %v862, %v861
      %v876 = vpack.c.bf16 %v864, %v863
      %v877 = vpack.c.bf16 %v866, %v865
      %v878 = vpack.c.bf16 %v868, %v867
      %v879 = vpack.c.bf16 %v870, %v869
      %v880 = vld [vmem:[%s5] sm:$0xf]
      %v881 = vld [vmem:[%s5 + $0x4] sm:$0xf]
      %v882 = vld [vmem:[%s5 + $0x8] sm:$0xf]
      %v883 = vld [vmem:[%s5 + $0xc] sm:$0xf]
      %v884 = vld [vmem:[%s5 + $0x10] sm:$0xf]
      %v885 = vld [vmem:[%s5 + $0x14] sm:$0xf]
      %v886 = vld [vmem:[%s5 + $0x18] sm:$0xf]
      %v887 = vld [vmem:[%s5 + $0x1c] sm:$0xf]
      %v888 = vld [vmem:[%s5 + $0x20] sm:$0xf]
      %v889 = vld [vmem:[%s5 + $0x24] sm:$0xf]
      %v890 = vld [vmem:[%s5 + $0x28] sm:$0xf]
      %v891 = vld [vmem:[%s5 + $0x2c] sm:$0xf]
      %v892 = vld [vmem:[%s5 + $0x30] sm:$0xf]
      %v893 = vld [vmem:[%s5 + $0x34] sm:$0xf]
      %v894 = vld [vmem:[%s5 + $0x38] sm:$0xf]
      %v895 = vld [vmem:[%s5 + $0x3c] sm:$0xf]
      %v896 = vld [vmem:[%s6] sm:$0x1]
      %v898 = vlaneseq
      %v899 = vshrl.u32 %v898, 7
      %v900 = vsub.s32 0, %v899
      %v901 = vrot.slane %v896, %v900
      %v919 = vunpack.c.l.b16 %v880
      %v920 = vunpack.c.l.b16 %v881
      %v921 = vunpack.c.l.b16 %v882
      %v922 = vunpack.c.l.b16 %v883
      %v923 = vunpack.c.l.b16 %v884
      %v924 = vunpack.c.l.b16 %v885
      %v925 = vunpack.c.l.b16 %v886
      %v926 = vunpack.c.l.b16 %v887
      %v927 = vunpack.c.l.b16 %v888
      %v928 = vunpack.c.l.b16 %v889
      %v929 = vunpack.c.l.b16 %v890
      %v930 = vunpack.c.l.b16 %v891
      %v931 = vunpack.c.l.b16 %v892
      %v932 = vunpack.c.l.b16 %v893
      %v933 = vunpack.c.l.b16 %v894
      %v934 = vunpack.c.l.b16 %v895
      %v935 = vpack.c.b16 %v920, %v919
      %v936 = vpack.c.b16 %v922, %v921
      %v937 = vpack.c.b16 %v924, %v923
      %v938 = vpack.c.b16 %v926, %v925
      %v939 = vpack.c.b16 %v928, %v927
      %v940 = vpack.c.b16 %v930, %v929
      %v941 = vpack.c.b16 %v932, %v931
      %v942 = vpack.c.b16 %v934, %v933
      %951 = vmatprep.subr.bf16.mxu0 0
      %952 = vmatpush1.bf16.msra.mxu0 %v935
      %953 = vmatprep.subr.bf16.mxu0 0
      %954 = vmatpush1.bf16.msra.mxu0 %v936
      %955 = vmatprep.subr.bf16.mxu0 0
      %956 = vmatpush1.bf16.msra.mxu0 %v937
      %957 = vmatprep.subr.bf16.mxu0 0
      %958 = vmatpush1.bf16.msra.mxu0 %v938
      %959 = vmatprep.subr.bf16.mxu0 0
      %960 = vmatpush1.bf16.msra.mxu0 %v939
      %961 = vmatprep.subr.bf16.mxu0 0
      %962 = vmatpush1.bf16.msra.mxu0 %v940
      %963 = vmatprep.subr.bf16.mxu0 0
      %964 = vmatpush1.bf16.msra.mxu0 %v941
      %965 = vmatprep.subr.bf16.mxu0 0
      %966 = vmatpush1.bf16.msra.mxu0 %v942
      %967 = vmatprep.subr.bf16.mxu0 0
      %968 = vmatpush1.bf16.msra.mxu0 0
      %969 = vmatprep.subr.bf16.mxu0 0
      %970 = vmatpush1.bf16.msra.mxu0 0
      %971 = vmatprep.subr.bf16.mxu0 0
      %972 = vmatpush1.bf16.msra.mxu0 0
      %973 = vmatprep.subr.bf16.mxu0 0
      %974 = vmatpush1.bf16.msra.mxu0 0
      %975 = vmatprep.subr.bf16.mxu0 0
      %976 = vmatpush1.bf16.msra.mxu0 0
      %977 = vmatprep.subr.bf16.mxu0 0
      %978 = vmatpush1.bf16.msra.mxu0 0
      %979 = vmatprep.subr.bf16.mxu0 0
      %980 = vmatpush1.bf16.msra.mxu0 0
      %981 = vmatprep.subr.bf16.mxu0 0
      %982 = vmatpush1.bf16.msra.mxu0 0
      %983 = vmatprep.mubr.bf16.mxu0 0
      %984 = vmatmul.mubr.bf16.gmra.mrb[0].mxu0 %v871
      %v985 = vpop.f32.mrb[0].mxu0
      %v986 = vadd.f32 %v901, %v985
      %v987 = vpop.f32.mrb[0].mxu0
      %v988 = vpop.f32.mrb[0].mxu0
      %v989 = vadd.f32 %v901, %v988
      %v990 = vpop.f32.mrb[0].mxu0
      %991 = vmatprep.mubr.bf16.mxu0 0
      %992 = vmatmul.mubr.bf16.gmra.mrb[0].mxu0 %v872
      %v993 = vpop.f32.mrb[0].mxu0
      %v994 = vadd.f32 %v901, %v993
      %v995 = vpop.f32.mrb[0].mxu0
      %v996 = vpop.f32.mrb[0].mxu0
      %v997 = vadd.f32 %v901, %v996
      %v998 = vpop.f32.mrb[0].mxu0
      %999 = vmatprep.mubr.bf16.mxu0 0
      %1000 = vmatmul.mubr.bf16.gmra.mrb[0].mxu0 %v873
      %v1001 = vpop.f32.mrb[0].mxu0
      %v1002 = vadd.f32 %v901, %v1001
      %v1003 = vpop.f32.mrb[0].mxu0
      %v1004 = vpop.f32.mrb[0].mxu0
      %v1005 = vadd.f32 %v901, %v1004
      %v1006 = vpop.f32.mrb[0].mxu0
      %1007 = vmatprep.mubr.bf16.mxu0 0
      %1008 = vmatmul.mubr.bf16.gmra.mrb[0].mxu0 %v874
      %v1009 = vpop.f32.mrb[0].mxu0
      %v1010 = vadd.f32 %v901, %v1009
      %v1011 = vpop.f32.mrb[0].mxu0
      %v1012 = vpop.f32.mrb[0].mxu0
      %v1013 = vadd.f32 %v901, %v1012
      %v1014 = vpop.f32.mrb[0].mxu0
      %1015 = vmatprep.mubr.bf16.mxu0 0
      %1016 = vmatmul.mubr.bf16.gmra.mrb[0].mxu0 %v875
      %v1017 = vpop.f32.mrb[0].mxu0
      %v1018 = vadd.f32 %v901, %v1017
      %v1019 = vpop.f32.mrb[0].mxu0
      %v1020 = vpop.f32.mrb[0].mxu0
      %v1021 = vadd.f32 %v901, %v1020
      %v1022 = vpop.f32.mrb[0].mxu0
      %1023 = vmatprep.mubr.bf16.mxu0 0
      %1024 = vmatmul.mubr.bf16.gmra.mrb[0].mxu0 %v876
      %v1025 = vpop.f32.mrb[0].mxu0
      %v1026 = vadd.f32 %v901, %v1025
      %v1027 = vpop.f32.mrb[0].mxu0
      %v1028 = vpop.f32.mrb[0].mxu0
      %v1029 = vadd.f32 %v901, %v1028
      %v1030 = vpop.f32.mrb[0].mxu0
      %1031 = vmatprep.mubr.bf16.mxu0 0
      %1032 = vmatmul.mubr.bf16.gmra.mrb[0].mxu0 %v877
      %v1033 = vpop.f32.mrb[0].mxu0
      %v1034 = vadd.f32 %v901, %v1033
      %v1035 = vpop.f32.mrb[0].mxu0
      %v1036 = vpop.f32.mrb[0].mxu0
      %v1037 = vadd.f32 %v901, %v1036
      %v1038 = vpop.f32.mrb[0].mxu0
      %1039 = vmatprep.mubr.bf16.mxu0 0
      %1040 = vmatmul.mubr.bf16.gmra.mrb[0].mxu0 %v878
      %v1041 = vpop.f32.mrb[0].mxu0
      %v1042 = vadd.f32 %v901, %v1041
      %v1043 = vpop.f32.mrb[0].mxu0
      %v1044 = vpop.f32.mrb[0].mxu0
      %v1045 = vadd.f32 %v901, %v1044
      %v1046 = vpop.f32.mrb[0].mxu0
      %1047 = vmatprep.mubr.bf16.mxu0 0
      %1048 = vmatmul.mubr.bf16.gmra.mrb[0].mxu0 %v879
      %v1049 = vpop.f32.mrb[0].mxu0
      %v1050 = vadd.f32 %v901, %v1049
      %v1051 = vpop.f32.mrb[0].mxu0
      %v1052 = vpop.f32.mrb[0].mxu0
      %v1053 = vadd.f32 %v901, %v1052
      %v1054 = vpop.f32.mrb[0].mxu0
      %1055 = vdwg.mxu0
      %v1056 = vadd.f32 %v986, %v283
      %v1057 = vadd.f32 %v989, %v284
      %v1058 = vadd.f32 %v994, %v285
      %v1059 = vadd.f32 %v997, %v286
      %v1060 = vadd.f32 %v1002, %v287
      %v1061 = vadd.f32 %v1005, %v288
      %v1062 = vadd.f32 %v1010, %v289
      %v1063 = vadd.f32 %v1013, %v290
      %v1064 = vadd.f32 %v1018, %v291
      %v1065 = vadd.f32 %v1021, %v292
      %v1066 = vadd.f32 %v1026, %v293
      %v1067 = vadd.f32 %v1029, %v294
      %v1068 = vadd.f32 %v1034, %v295
      %v1069 = vadd.f32 %v1037, %v296
      %v1070 = vadd.f32 %v1042, %v297
      %v1071 = vadd.f32 %v1045, %v298
      %v1072 = vadd.f32 %v1050, %v299
      %v1073 = vadd.f32 %v1053, %v300
      %v1074 = vmax.f32 %v1056, 0.0
      %v1075 = vmax.f32 %v1057, 0.0
      %v1076 = vmax.f32 %v1058, 0.0
      %v1077 = vmax.f32 %v1059, 0.0
      %v1078 = vmax.f32 %v1060, 0.0
      %v1079 = vmax.f32 %v1061, 0.0
      %v1080 = vmax.f32 %v1062, 0.0
      %v1081 = vmax.f32 %v1063, 0.0
      %v1082 = vmax.f32 %v1064, 0.0
      %v1083 = vmax.f32 %v1065, 0.0
      %v1084 = vmax.f32 %v1066, 0.0
      %v1085 = vmax.f32 %v1067, 0.0
      %v1086 = vmax.f32 %v1068, 0.0
      %v1087 = vmax.f32 %v1069, 0.0
      %v1088 = vmax.f32 %v1070, 0.0
      %v1089 = vmax.f32 %v1071, 0.0
      %v1090 = vmax.f32 %v1072, 0.0
      %v1091 = vmax.f32 %v1073, 0.0
      %v1092 = vpack.c.bf16 %v1075, %v1074
      %v1093 = vpack.c.bf16 %v1077, %v1076
      %v1094 = vpack.c.bf16 %v1079, %v1078
      %v1095 = vpack.c.bf16 %v1081, %v1080
      %v1096 = vpack.c.bf16 %v1083, %v1082
      %v1097 = vpack.c.bf16 %v1085, %v1084
      %v1098 = vpack.c.bf16 %v1087, %v1086
      %v1099 = vpack.c.bf16 %v1089, %v1088
      %v1100 = vpack.c.bf16 %v1091, %v1090
      %v1110 = vunpack.c.l.b16 %v1092
      %v1111 = vunpack.c.h.b16 %v1092
      %v1112 = vunpack.c.l.b16 %v1093
      %v1113 = vunpack.c.h.b16 %v1093
      %v1114 = vunpack.c.l.b16 %v1094
      %v1115 = vunpack.c.h.b16 %v1094
      %v1116 = vunpack.c.l.b16 %v1095
      %v1117 = vunpack.c.h.b16 %v1095
      %v1118 = vunpack.c.l.b16 %v1096
      %v1119 = vunpack.c.h.b16 %v1096
      %v1120 = vunpack.c.l.b16 %v1097
      %v1121 = vunpack.c.h.b16 %v1097
      %v1122 = vunpack.c.l.b16 %v1098
      %v1123 = vunpack.c.h.b16 %v1098
      %v1124 = vunpack.c.l.b16 %v1099
      %v1125 = vunpack.c.h.b16 %v1099
      %v1126 = vunpack.c.l.b16 %v1100
      %v1127 = vunpack.c.h.b16 %v1100
      %v1128 = vpack.c.b16 %v1110, %v1110
      %v1129 = vpack.c.b16 %v1111, %v1111
      %v1130 = vpack.c.b16 %v1112, %v1112
      %v1131 = vpack.c.b16 %v1113, %v1113
      %v1132 = vpack.c.b16 %v1114, %v1114
      %v1133 = vpack.c.b16 %v1115, %v1115
      %v1134 = vpack.c.b16 %v1116, %v1116
      %v1135 = vpack.c.b16 %v1117, %v1117
      %v1136 = vpack.c.b16 %v1118, %v1118
      %v1137 = vpack.c.b16 %v1119, %v1119
      %v1138 = vpack.c.b16 %v1120, %v1120
      %v1139 = vpack.c.b16 %v1121, %v1121
      %v1140 = vpack.c.b16 %v1122, %v1122
      %v1141 = vpack.c.b16 %v1123, %v1123
      %v1142 = vpack.c.b16 %v1124, %v1124
      %v1143 = vpack.c.b16 %v1125, %v1125
      %v1144 = vpack.c.b16 %v1126, %v1126
      %v1145 = vpack.c.b16 %v1127, %v1127
      %1164 = vst [vmem:[%s280] sm:$0xf] %v1128
      %1165 = vst [vmem:[%s280 + $0x4] sm:$0xf] %v1129
      %1166 = vst [vmem:[%s280 + $0x8] sm:$0xf] %v1130
      %1167 = vst [vmem:[%s280 + $0xc] sm:$0xf] %v1131
      %1168 = vst [vmem:[%s280 + $0x10] sm:$0xf] %v1132
      %1169 = vst [vmem:[%s280 + $0x14] sm:$0xf] %v1133
      %1170 = vst [vmem:[%s280 + $0x18] sm:$0xf] %v1134
      %1171 = vst [vmem:[%s280 + $0x1c] sm:$0xf] %v1135
      %1172 = vst [vmem:[%s280 + $0x20] sm:$0xf] %v1136
      %1173 = vst [vmem:[%s280 + $0x24] sm:$0xf] %v1137
      %1174 = vst [vmem:[%s280 + $0x28] sm:$0xf] %v1138
      %1175 = vst [vmem:[%s280 + $0x2c] sm:$0xf] %v1139
      %1176 = vst [vmem:[%s280 + $0x30] sm:$0xf] %v1140
      %1177 = vst [vmem:[%s280 + $0x34] sm:$0xf] %v1141
      %1178 = vst [vmem:[%s280 + $0x38] sm:$0xf] %v1142
      %1179 = vst [vmem:[%s280 + $0x3c] sm:$0xf] %v1143
      %1180 = vst [vmem:[%s280 + $0x40] sm:$0xf] %v1144
      %1181 = vst [vmem:[%s280 + $0x44] sm:$0xf] %v1145
      %s1182 = smul.u32 18, %s18
      %p1183 = scmp.lt.s32.totalorder %s1182, 35
      %s1184 = scalar_select %p1183, %s1182, 35
      %s1185 = smul.addr %s1184, 4
      %s1186 = scalar_lea.vmem %s7, %s1185
      // Predicated region
      $region49: #{basic_block_forward_nhwc.1} parent=47 // pred_check
        %p1187 = pneg %p188
      $region50: #{basic_block_forward_nhwc.1} parent=47 // pred_check_branch
        %1189 = sbr.rel (%p1187) target = $region52
      $region51: #{basic_block_forward_nhwc.1} parent=47 // pred_region
        %s1190 = smul.u32 18, %s18
      $region52: #{basic_block_forward_nhwc.1} parent=47 // pred_fallthru
        _
    $region48: #{basic_block_forward_nhwc.1} parent=5 // pred_fallthru
      _
    %p1191 = scmp.le.s32.totalorder 2, %s13
    // Predicated region
    $region53: #{basic_block_forward_nhwc.1} parent=5 // pred_check
      %p1192 = pneg %p1191
    $region54: #{basic_block_forward_nhwc.1} parent=5 // pred_check_branch
      %1194 = sbr.rel (%p1192) target = $region56
    $region55: #{basic_block_forward_nhwc.1} parent=5 // pred_region
      %s1195 = ssub.s32 %s13, 2
      // Predicated region
      $region57: #{basic_block_forward_nhwc.1} parent=55 // pred_check
        %p1196 = pneg %p194
      $region58: #{basic_block_forward_nhwc.1} parent=55 // pred_check_branch
        %1198 = sbr.rel (%p1196) target = $region60
      $region59: #{basic_block_forward_nhwc.1} parent=55 // pred_region
        %s1199 = smul.u32 18, %s19
        %p1200 = scmp.lt.s32.totalorder %s1199, 35
        %s1201 = scalar_select %p1200, %s1199, 35
        %s1202 = smul.addr %s1201, 4
        %s1203 = scalar_lea.vmem %s7, %s1202
      $region60: #{basic_block_forward_nhwc.1} parent=55 // pred_fallthru
        _
    $region56: #{basic_block_forward_nhwc.1} parent=5 // pred_fallthru
      _
  $region6: #{basic_block_forward_nhwc.1} parent=0 // loop_footer
    %s17 = sadd.s32 1, %s13
  $region7: #{basic_block_forward_nhwc.1} parent=0 // loop_footer_branch
    %12 = sbr.rel target = $region3
  $region8: #{basic_block_forward_nhwc.1} parent=0 // loop_exit
    _

</llo_original>
